<compile_context>
chip_gen: v7x
topology: tpu7x:2x2x1
jax: 0.10.0
libtpu: 0.0.40
codegen_flags: <defaults>
</compile_context>

<pallas_src>
import numpy as np
import jax
import jax.numpy as jnp
from jax.experimental import pallas as pl
from jax.experimental.pallas import tpu as pltpu


def _dog_kernel(pool2_ref, up2_ref, x_ref, down_ref, diff_ref):
    # x block: (TR, 2kW); each lane row packs k vertical row-pairs.
    x = x_ref[...]

    # 2x2 average pool = one matmul with the stacked block-diagonal operator
    # (vertical pair-sum folded in, entries 0.25), f32 accumulation on MXU.
    down = jnp.dot(x, pool2_ref[...], preferred_element_type=jnp.float32)
    down_cast = down.astype(down_ref.dtype)
    down_ref[...] = down_cast                       # lane-dense store (kWh wide)

    # Nearest-neighbor 2x upsample (both rows of each vertical pair and both
    # columns) via one matmul; then a single full-width lane-dense diff store.
    up = jnp.dot(down_cast, up2_ref[...], preferred_element_type=jnp.float32)
    diff_ref[...] = x - up.astype(diff_ref.dtype)


def _pick_pack(R, W, Wh):
    """k = number of vertical row-pairs packed per lane row (k must divide R)."""
    best = 1
    kmax = min(R, max(1, 1024 // max(1, Wh)))        # keep operator matrices modest
    for k in range(1, kmax + 1):
        if R % k:
            continue
        if k * Wh >= 128 and (2 * k * W) % 128 == 0:
            return k                                  # fully lane-dense outputs
        if k * Wh <= 256:
            best = k                                  # partial densification fallback
    return best


def _pick_block_rows(R2, row_in_bytes, row_total_bytes, op_bytes):
    """Rows per grid step: ~3 MiB input blocks, >=4 steps, VMEM budget aware."""
    if R2 <= 8:
        return R2                                     # block dim == full dim is legal
    tr = max(8, (3 << 20) // max(1, row_in_bytes))    # ~3 MiB input block target
    budget = (40 << 20) - 2 * op_bytes                # double-buffered data budget
    if budget > 0:
        tr = min(tr, max(8, budget // max(1, 2 * row_total_bytes)))
    if R2 >= 32:
        tr = min(tr, R2 // 4)                         # >= 4 steps (2 per v7x TC)
    tr = min(tr, R2)
    tr = max(8, (tr // 8) * 8)                        # sublane multiple of 8
    return R2 if tr >= R2 else tr                     # ragged last block otherwise


@jax.jit
def dog_forward(x):
    N, C, H, W = x.shape
    if H % 2 or W % 2:
        raise ValueError("dog_forward requires even H and W (avg_pool2d(2)).")
    Hh, Wh = H // 2, W // 2
    dtype = x.dtype
    itemsize = jnp.dtype(dtype).itemsize

    R = N * C * Hh                     # total vertical row-pairs
    k = _pick_pack(R, W, Wh)
    R2 = R // k
    in_w = 2 * k * W                   # packed input / diff lane width
    dn_w = k * Wh                      # packed down lane width

    # Block-diagonal horizontal pool / nearest-upsample operators.  Values
    # (0.25, 1.0) are exact in bf16, so store them in x's dtype: matching
    # MXU operand dtypes, native bf16 path on v7x for bf16 inputs.
    r = np.arange(in_w)
    c = np.arange(dn_w)
    same_pair = (r[:, None] // (2 * W)) == (c[None, :] // Wh)
    same_col = (((r[:, None] % (2 * W)) % W) // 2) == (c[None, :] % Wh)
    mask = same_pair & same_col
    pool2 = jnp.asarray(np.where(mask, 0.25, 0.0), dtype=dtype)   # (in_w, dn_w)
    up2 = jnp.asarray(np.where(mask.T, 1.0, 0.0), dtype=dtype)    # (dn_w, in_w)

    op_bytes = 2 * in_w * dn_w * itemsize
    row_in_bytes = in_w * itemsize
    row_total_bytes = (2 * in_w + dn_w) * itemsize    # in + diff + down per row
    tr = _pick_block_rows(R2, row_in_bytes, row_total_bytes, op_bytes)
    grid = (pl.cdiv(R2, tr),)

    vmem_need = 2 * tr * row_total_bytes + 2 * op_bytes + (4 << 20)
    vmem_limit = int(min(max(vmem_need, 32 << 20), 56 << 20))

    x2 = x.reshape(R2, in_w)                          # free row-major view

    down2, diff2 = pl.pallas_call(
        _dog_kernel,
        out_shape=(
            jax.ShapeDtypeStruct((R2, dn_w), dtype),
            jax.ShapeDtypeStruct((R2, in_w), dtype),
        ),
        grid_spec=pltpu.PrefetchScalarGridSpec(
            num_scalar_prefetch=0,
            grid=grid,
            in_specs=[
                pl.BlockSpec((in_w, dn_w), lambda i: (0, 0)),   # pool operator (resident)
                pl.BlockSpec((dn_w, in_w), lambda i: (0, 0)),   # upsample operator
                pl.BlockSpec((tr, in_w), lambda i: (i, 0)),     # packed input rows
            ],
            out_specs=[
                pl.BlockSpec((tr, dn_w), lambda i: (i, 0)),     # down (lane-dense)
                pl.BlockSpec((tr, in_w), lambda i: (i, 0)),     # diff (full-width)
            ],
        ),
        compiler_params=pltpu.CompilerParams(
            dimension_semantics=("parallel",),
            vmem_limit_bytes=vmem_limit),
    )(pool2, up2, x2)

    down = down2.reshape(N, C, Hh, Wh)                # free reshapes back to NCHW
    diff = diff2.reshape(N, C, H, W)
    return down, diff


def dog_reference(x):
    # Pure-JAX reference matching torch semantics.
    N, C, H, W = x.shape
    down = x.reshape(N, C, H // 2, 2, W // 2, 2).mean(axis=(3, 5))
    up = jnp.repeat(jnp.repeat(down, 2, axis=2), 2, axis=3)
    return down, x - up


if __name__ == "__main__":
    key = jax.random.PRNGKey(0)
    keys = jax.random.split(key, 3)
    shapes = [
        (2, 4, 16, 16),     # module-scale demo (small W -> lane packing path)
        (1, 3, 28, 28),     # awkward W (non-128-friendly, best-effort packing)
        (2, 8, 64, 128),    # multi-step grid / ragged-free path
    ]
    for kk, shape in zip(keys, shapes):
        x = jax.random.normal(kk, shape, dtype=jnp.float32)
        down, diff = dog_forward(x)
        jax.block_until_ready(down)
        jax.block_until_ready(diff)

        down_ref, diff_ref = dog_reference(x)
        N, C, H, W = shape
        assert down.shape == (N, C, H // 2, W // 2) and down.dtype == x.dtype
        assert diff.shape == shape and diff.dtype == x.dtype
        assert jnp.allclose(down, down_ref, atol=1e-5, rtol=1e-5)
        assert jnp.allclose(diff, diff_ref, atol=1e-5, rtol=1e-5)

    print("KERNEL_OK")
</pallas_src>

<mosaic_0001>
module attributes {stable_mosaic.version = 11 : i64} {
  func.func @_dog_kernel(%arg0: i32, %arg1: memref<512x128xf32, #tpu.memory_space<vmem>>, %arg2: memref<128x512xf32, #tpu.memory_space<vmem>>, %arg3: memref<4x512xf32, #tpu.memory_space<vmem>>, %arg4: memref<4x128xf32, #tpu.memory_space<vmem>>, %arg5: memref<4x512xf32, #tpu.memory_space<vmem>>) attributes {dimension_semantics = [#tpu.dimension_semantics<parallel>], iteration_bounds = array<i64: 1>, scalar_prefetch = 0 : i64, scratch_operands = 0 : i64, tpu.core_type = #tpu.core_type<tc>, window_params = [{pipeline_mode = #tpu.pipeline_mode<synchronous>, transform_indices = @transform_0, window_bounds = array<i64: 512, 128>}, {pipeline_mode = #tpu.pipeline_mode<synchronous>, transform_indices = @transform_1, window_bounds = array<i64: 128, 512>}, {transform_indices = @transform_2, window_bounds = array<i64: 4, 512>}, {transform_indices = @transform_3, window_bounds = array<i64: 4, 128>}, {transform_indices = @transform_4, window_bounds = array<i64: 4, 512>}]} {
    %c0 = arith.constant 0 : index
    %c0_0 = arith.constant 0 : index
    %0 = vector.load %arg3[%c0, %c0_0] : memref<4x512xf32, #tpu.memory_space<vmem>>, vector<4x512xf32>
    %c0_1 = arith.constant 0 : index
    %c0_2 = arith.constant 0 : index
    %1 = vector.load %arg1[%c0_1, %c0_2] : memref<512x128xf32, #tpu.memory_space<vmem>>, vector<512x128xf32>
    %cst = arith.constant dense<0.000000e+00> : vector<4x128xf32>
    %2 = tpu.matmul %0, %1, %cst {dimension_numbers = #tpu.dot_dimension_numbers<[1], [0], [0], [1], [0, 0, 1, 1], [], []>} : vector<4x512xf32>, vector<512x128xf32>, vector<4x128xf32> -> vector<4x128xf32>
    %c0_3 = arith.constant 0 : index
    %c0_4 = arith.constant 0 : index
    %3 = vector.load %arg4[%c0_3, %c0_4] : memref<4x128xf32, #tpu.memory_space<vmem>>, vector<4x128xf32>
    tpu.vector_store %arg4[%c0_3, %c0_4], %2 {strides = array<i32>} : memref<4x128xf32, #tpu.memory_space<vmem>>, vector<4x128xf32>,
    %c0_5 = arith.constant 0 : index
    %c0_6 = arith.constant 0 : index
    %4 = vector.load %arg2[%c0_5, %c0_6] : memref<128x512xf32, #tpu.memory_space<vmem>>, vector<128x512xf32>
    %cst_7 = arith.constant dense<0.000000e+00> : vector<4x512xf32>
    %5 = tpu.matmul %2, %4, %cst_7 {dimension_numbers = #tpu.dot_dimension_numbers<[1], [0], [0], [1], [0, 0, 1, 1], [], []>} : vector<4x128xf32>, vector<128x512xf32>, vector<4x512xf32> -> vector<4x512xf32>
    %6 = arith.subf %0, %5 : vector<4x512xf32>
    %c0_8 = arith.constant 0 : index
    %c0_9 = arith.constant 0 : index
    %7 = vector.load %arg5[%c0_8, %c0_9] : memref<4x512xf32, #tpu.memory_space<vmem>>, vector<4x512xf32>
    tpu.vector_store %arg5[%c0_8, %c0_9], %6 {strides = array<i32>} : memref<4x512xf32, #tpu.memory_space<vmem>>, vector<4x512xf32>,
    return
  }
  func.func @transform_0(%arg0: i32) -> (i32, i32) {
    %c0_i32 = arith.constant 0 : i32
    %c0_i32_0 = arith.constant 0 : i32
    %c0_i32_1 = arith.constant 0 : i32
    return %c0_i32, %c0_i32_0 : i32, i32
  }
  func.func @transform_1(%arg0: i32) -> (i32, i32) {
    %c0_i32 = arith.constant 0 : i32
    %c0_i32_0 = arith.constant 0 : i32
    %c0_i32_1 = arith.constant 0 : i32
    return %c0_i32, %c0_i32_0 : i32, i32
  }
  func.func @transform_2(%arg0: i32) -> (i32, i32) {
    %c0_i32 = arith.constant 0 : i32
    %c0_i32_0 = arith.constant 0 : i32
    return %arg0, %c0_i32 : i32, i32
  }
  func.func @transform_3(%arg0: i32) -> (i32, i32) {
    %c0_i32 = arith.constant 0 : i32
    %c0_i32_0 = arith.constant 0 : i32
    return %arg0, %c0_i32 : i32, i32
  }
  func.func @transform_4(%arg0: i32) -> (i32, i32) {
    %c0_i32 = arith.constant 0 : i32
    %c0_i32_0 = arith.constant 0 : i32
    return %arg0, %c0_i32 : i32, i32
  }
}

</mosaic_0001>

<llo_original>
// kernel: dog_forward.1
$region0: #{dog_forward.1}
  #allocation0 [shape = 'u32[]', space=smem, size = 0x4, offset = 0x4, fixed_abs, tag = 'smem constant byte address 0x4 - core index']
  #allocation1 [shape = 'u32[144,128]{1,0:T(1,128)}', space=vmem, size = 0x12000, scoped, tag = 'internal scratch']
  %s0 = inlined_call_operand.hbm [shape: f32[512,128], index: 0, kind: input, shape index: {}]
  %s1 = inlined_call_operand.hbm [shape: f32[128,512], index: 1, kind: input, shape index: {}]
  %s2 = inlined_call_operand.vmem [shape: f32[4,512], index: 2, kind: input, shape index: {}]
  %s3 = inlined_call_operand.vmem [shape: f32[4,128], index: 3, kind: output, shape index: {0}]
  %s4 = inlined_call_operand.vmem [shape: f32[4,512], index: 4, kind: output, shape index: {1}]
  %5 = xla_tuple %s3, %s4
  %s6 = sld [smem:[#allocation0]]
  $region38: #{dog_forward.1} parent=0
    _
  %s8 = ssub.s32 1, %s6
  %s9 = scalar_select 0, %s8, %s6
  $region1: #{dog_forward.1} parent=0
    #allocation2 [shape = 'u8[262144]{0}', space=vmem, size = 0x40000, scoped, tag = 'input window, operand 0, single buffered']
    #allocation3 [shape = 's32[1]{0}', space=sflag, size = 0x4, scoped, tag = 'scoped memory for dog_forward.1']
    #allocation4 [shape = 'u8[262144]{0}', space=vmem, size = 0x40000, scoped, tag = 'input window, operand 1, single buffered']
    #allocation5 [shape = 's32[1]{0}', space=sflag, size = 0x4, scoped, tag = 'scoped memory for dog_forward.1']
    %10 = vsyncpa [#allocation3], 0
    %11 = vsyncpa [#allocation5], 0
    // Predicated region
    $region2: #{dog_forward.1} parent=1 // pred_check
      _
    $region3: #{dog_forward.1} parent=1 // pred_check_branch
      %13 = sbr.rel (0) target = $region5
    $region4: #{dog_forward.1} parent=1 // pred_region
      %s15 = ssub.s32 8192, 8192
      %16 = vsyncadd [#allocation3], %s15
      %s17 = sshll.u32 [#allocation2], 4
      %s18 = int_to_ptr.vmem [resolvable:$true] %s17
      %23 = dma.hbm_to_vmem [thread:$0]  %s0, 8192, %s18, [#allocation3], 128, 128, 8
    $region5: #{dog_forward.1} parent=1 // pred_fallthru
      _
    // Predicated region
    $region6: #{dog_forward.1} parent=1 // pred_check
      _
    $region7: #{dog_forward.1} parent=1 // pred_check_branch
      %25 = sbr.rel (0) target = $region9
    $region8: #{dog_forward.1} parent=1 // pred_region
      %s27 = ssub.s32 8192, 8192
      %28 = vsyncadd [#allocation5], %s27
      %s29 = sshll.u32 [#allocation4], 4
      %s30 = int_to_ptr.vmem [resolvable:$true] %s29
      %35 = dma.hbm_to_vmem [thread:$0]  %s1, 8192, %s30, [#allocation5], 512, 512, 32
    $region9: #{dog_forward.1} parent=1 // pred_fallthru
      _
    // Predicated region
    $region10: #{dog_forward.1} parent=1 // pred_check
      _
    $region11: #{dog_forward.1} parent=1 // pred_check_branch
      %37 = sbr.rel (0) target = $region13
    $region12: #{dog_forward.1} parent=1 // pred_region
      _
    $region13: #{dog_forward.1} parent=1 // pred_fallthru
      _
    // Predicated region
    $region14: #{dog_forward.1} parent=1 // pred_check
      _
    $region15: #{dog_forward.1} parent=1 // pred_check_branch
      %39 = sbr.rel (0) target = $region17
    $region16: #{dog_forward.1} parent=1 // pred_region
      %40 = dma.done [#allocation3], 8192
    $region17: #{dog_forward.1} parent=1 // pred_fallthru
      _
    // Predicated region
    $region18: #{dog_forward.1} parent=1 // pred_check
      _
    $region19: #{dog_forward.1} parent=1 // pred_check_branch
      %42 = sbr.rel (0) target = $region21
    $region20: #{dog_forward.1} parent=1 // pred_region
      %43 = dma.done [#allocation5], 8192
    $region21: #{dog_forward.1} parent=1 // pred_fallthru
      _
    %v44 = vld [vmem:[%s2] sm:$0xff]
    %v45 = vld [vmem:[%s2 + $0x8] sm:$0xff]
    %v46 = vld [vmem:[#allocation2] sm:$0xff]
    %v47 = vld [vmem:[#allocation2 + $0x8] sm:$0xff]
    %v48 = vld [vmem:[#allocation2 + $0x10] sm:$0xff]
    %v49 = vld [vmem:[#allocation2 + $0x18] sm:$0xff]
    %v50 = vld [vmem:[#allocation2 + $0x20] sm:$0xff]
    %v51 = vld [vmem:[#allocation2 + $0x28] sm:$0xff]
    %v52 = vld [vmem:[#allocation2 + $0x30] sm:$0xff]
    %v53 = vld [vmem:[#allocation2 + $0x38] sm:$0xff]
    %v54 = vld [vmem:[#allocation2 + $0x40] sm:$0xff]
    %v55 = vld [vmem:[#allocation2 + $0x48] sm:$0xff]
    %v56 = vld [vmem:[#allocation2 + $0x50] sm:$0xff]
    %v57 = vld [vmem:[#allocation2 + $0x58] sm:$0xff]
    %v58 = vld [vmem:[#allocation2 + $0x60] sm:$0xff]
    %v59 = vld [vmem:[#allocation2 + $0x68] sm:$0xff]
    %v60 = vld [vmem:[#allocation2 + $0x70] sm:$0xff]
    %v61 = vld [vmem:[#allocation2 + $0x78] sm:$0xff]
    %v62 = vld [vmem:[#allocation2 + $0x80] sm:$0xff]
    %v63 = vld [vmem:[#allocation2 + $0x88] sm:$0xff]
    %v64 = vld [vmem:[#allocation2 + $0x90] sm:$0xff]
    %v65 = vld [vmem:[#allocation2 + $0x98] sm:$0xff]
    %v66 = vld [vmem:[#allocation2 + $0xa0] sm:$0xff]
    %v67 = vld [vmem:[#allocation2 + $0xa8] sm:$0xff]
    %v68 = vld [vmem:[#allocation2 + $0xb0] sm:$0xff]
    %v69 = vld [vmem:[#allocation2 + $0xb8] sm:$0xff]
    %v70 = vld [vmem:[#allocation2 + $0xc0] sm:$0xff]
    %v71 = vld [vmem:[#allocation2 + $0xc8] sm:$0xff]
    %v72 = vld [vmem:[#allocation2 + $0xd0] sm:$0xff]
    %v73 = vld [vmem:[#allocation2 + $0xd8] sm:$0xff]
    %v74 = vld [vmem:[#allocation2 + $0xe0] sm:$0xff]
    %v75 = vld [vmem:[#allocation2 + $0xe8] sm:$0xff]
    %v76 = vld [vmem:[#allocation2 + $0xf0] sm:$0xff]
    %v77 = vld [vmem:[#allocation2 + $0xf8] sm:$0xff]
    %v78 = vld [vmem:[#allocation2 + $0x100] sm:$0xff]
    %v79 = vld [vmem:[#allocation2 + $0x108] sm:$0xff]
    %v80 = vld [vmem:[#allocation2 + $0x110] sm:$0xff]
    %v81 = vld [vmem:[#allocation2 + $0x118] sm:$0xff]
    %v82 = vld [vmem:[#allocation2 + $0x120] sm:$0xff]
    %v83 = vld [vmem:[#allocation2 + $0x128] sm:$0xff]
    %v84 = vld [vmem:[#allocation2 + $0x130] sm:$0xff]
    %v85 = vld [vmem:[#allocation2 + $0x138] sm:$0xff]
    %v86 = vld [vmem:[#allocation2 + $0x140] sm:$0xff]
    %v87 = vld [vmem:[#allocation2 + $0x148] sm:$0xff]
    %v88 = vld [vmem:[#allocation2 + $0x150] sm:$0xff]
    %v89 = vld [vmem:[#allocation2 + $0x158] sm:$0xff]
    %v90 = vld [vmem:[#allocation2 + $0x160] sm:$0xff]
    %v91 = vld [vmem:[#allocation2 + $0x168] sm:$0xff]
    %v92 = vld [vmem:[#allocation2 + $0x170] sm:$0xff]
    %v93 = vld [vmem:[#allocation2 + $0x178] sm:$0xff]
    %v94 = vld [vmem:[#allocation2 + $0x180] sm:$0xff]
    %v95 = vld [vmem:[#allocation2 + $0x188] sm:$0xff]
    %v96 = vld [vmem:[#allocation2 + $0x190] sm:$0xff]
    %v97 = vld [vmem:[#allocation2 + $0x198] sm:$0xff]
    %v98 = vld [vmem:[#allocation2 + $0x1a0] sm:$0xff]
    %v99 = vld [vmem:[#allocation2 + $0x1a8] sm:$0xff]
    %v100 = vld [vmem:[#allocation2 + $0x1b0] sm:$0xff]
    %v101 = vld [vmem:[#allocation2 + $0x1b8] sm:$0xff]
    %v102 = vld [vmem:[#allocation2 + $0x1c0] sm:$0xff]
    %v103 = vld [vmem:[#allocation2 + $0x1c8] sm:$0xff]
    %v104 = vld [vmem:[#allocation2 + $0x1d0] sm:$0xff]
    %v105 = vld [vmem:[#allocation2 + $0x1d8] sm:$0xff]
    %v106 = vld [vmem:[#allocation2 + $0x1e0] sm:$0xff]
    %v107 = vld [vmem:[#allocation2 + $0x1e8] sm:$0xff]
    %v108 = vld [vmem:[#allocation2 + $0x1f0] sm:$0xff]
    %v109 = vld [vmem:[#allocation2 + $0x1f8] sm:$0xff]
    %v112 = vcombine.high %v44, %v44
    %v113 = vcombine.high %v45, %v45
    %116 = vmatprep.subr.mxu0 0.0
    %117 = vmatpush1.msra.mxu0 %v46
    %118 = vmatprep.subr.mxu0 0.0
    %119 = vmatpush1.msra.mxu0 %v47
    %120 = vmatprep.subr.mxu0 0.0
    %121 = vmatpush1.msra.mxu0 %v48
    %122 = vmatprep.subr.mxu0 0.0
    %123 = vmatpush1.msra.mxu0 %v49
    %124 = vmatprep.subr.mxu0 0.0
    %125 = vmatpush1.msra.mxu0 %v50
    %126 = vmatprep.subr.mxu0 0.0
    %127 = vmatpush1.msra.mxu0 %v51
    %128 = vmatprep.subr.mxu0 0.0
    %129 = vmatpush1.msra.mxu0 %v52
    %130 = vmatprep.subr.mxu0 0.0
    %131 = vmatpush1.msra.mxu0 %v53
    %132 = vmatprep.subr.mxu0 0.0
    %133 = vmatpush1.msra.mxu0 %v54
    %134 = vmatprep.subr.mxu0 0.0
    %135 = vmatpush1.msra.mxu0 %v55
    %136 = vmatprep.subr.mxu0 0.0
    %137 = vmatpush1.msra.mxu0 %v56
    %138 = vmatprep.subr.mxu0 0.0
    %139 = vmatpush1.msra.mxu0 %v57
    %140 = vmatprep.subr.mxu0 0.0
    %141 = vmatpush1.msra.mxu0 %v58
    %142 = vmatprep.subr.mxu0 0.0
    %143 = vmatpush1.msra.mxu0 %v59
    %144 = vmatprep.subr.mxu0 0.0
    %145 = vmatpush1.msra.mxu0 %v60
    %146 = vmatprep.subr.mxu0 0.0
    %147 = vmatpush1.msra.mxu0 %v61
    %148 = vmatprep.subr.mxu0 0.0
    %149 = vmatpush1.msra.mxu0 %v62
    %150 = vmatprep.subr.mxu0 0.0
    %151 = vmatpush1.msra.mxu0 %v63
    %152 = vmatprep.subr.mxu0 0.0
    %153 = vmatpush1.msra.mxu0 %v64
    %154 = vmatprep.subr.mxu0 0.0
    %155 = vmatpush1.msra.mxu0 %v65
    %156 = vmatprep.subr.mxu0 0.0
    %157 = vmatpush1.msra.mxu0 %v66
    %158 = vmatprep.subr.mxu0 0.0
    %159 = vmatpush1.msra.mxu0 %v67
    %160 = vmatprep.subr.mxu0 0.0
    %161 = vmatpush1.msra.mxu0 %v68
    %162 = vmatprep.subr.mxu0 0.0
    %163 = vmatpush1.msra.mxu0 %v69
    %164 = vmatprep.subr.mxu0 0.0
    %165 = vmatpush1.msra.mxu0 %v70
    %166 = vmatprep.subr.mxu0 0.0
    %167 = vmatpush1.msra.mxu0 %v71
    %168 = vmatprep.subr.mxu0 0.0
    %169 = vmatpush1.msra.mxu0 %v72
    %170 = vmatprep.subr.mxu0 0.0
    %171 = vmatpush1.msra.mxu0 %v73
    %172 = vmatprep.subr.mxu0 0.0
    %173 = vmatpush1.msra.mxu0 %v74
    %174 = vmatprep.subr.mxu0 0.0
    %175 = vmatpush1.msra.mxu0 %v75
    %176 = vmatprep.subr.mxu0 0.0
    %177 = vmatpush1.msra.mxu0 %v76
    %178 = vmatprep.subr.mxu0 0.0
    %179 = vmatpush1.msra.mxu0 %v77
    %180 = vmatprep.mubr.f32.mxu0 %v112
    %181 = vmatmul.mubr.f32.gmra.mrb[0].mxu0 %v44
    %v182 = vpop.f32.mrb[0].mxu0
    %v183 = vadd.f32 0.0, %v182
    %v184 = vpop.f32.mrb[0].mxu0
    %185 = vdwg.mxu0
    %186 = vmatprep.subr.mxu0 0.0
    %187 = vmatpush1.msra.mxu0 %v78
    %188 = vmatprep.subr.mxu0 0.0
    %189 = vmatpush1.msra.mxu0 %v79
    %190 = vmatprep.subr.mxu0 0.0
    %191 = vmatpush1.msra.mxu0 %v80
    %192 = vmatprep.subr.mxu0 0.0
    %193 = vmatpush1.msra.mxu0 %v81
    %194 = vmatprep.subr.mxu0 0.0
    %195 = vmatpush1.msra.mxu0 %v82
    %196 = vmatprep.subr.mxu0 0.0
    %197 = vmatpush1.msra.mxu0 %v83
    %198 = vmatprep.subr.mxu0 0.0
    %199 = vmatpush1.msra.mxu0 %v84
    %200 = vmatprep.subr.mxu0 0.0
    %201 = vmatpush1.msra.mxu0 %v85
    %202 = vmatprep.subr.mxu0 0.0
    %203 = vmatpush1.msra.mxu0 %v86
    %204 = vmatprep.subr.mxu0 0.0
    %205 = vmatpush1.msra.mxu0 %v87
    %206 = vmatprep.subr.mxu0 0.0
    %207 = vmatpush1.msra.mxu0 %v88
    %208 = vmatprep.subr.mxu0 0.0
    %209 = vmatpush1.msra.mxu0 %v89
    %210 = vmatprep.subr.mxu0 0.0
    %211 = vmatpush1.msra.mxu0 %v90
    %212 = vmatprep.subr.mxu0 0.0
    %213 = vmatpush1.msra.mxu0 %v91
    %214 = vmatprep.subr.mxu0 0.0
    %215 = vmatpush1.msra.mxu0 %v92
    %216 = vmatprep.subr.mxu0 0.0
    %217 = vmatpush1.msra.mxu0 %v93
    %218 = vmatprep.subr.mxu0 0.0
    %219 = vmatpush1.msra.mxu0 %v94
    %220 = vmatprep.subr.mxu0 0.0
    %221 = vmatpush1.msra.mxu0 %v95
    %222 = vmatprep.subr.mxu0 0.0
    %223 = vmatpush1.msra.mxu0 %v96
    %224 = vmatprep.subr.mxu0 0.0
    %225 = vmatpush1.msra.mxu0 %v97
    %226 = vmatprep.subr.mxu0 0.0
    %227 = vmatpush1.msra.mxu0 %v98
    %228 = vmatprep.subr.mxu0 0.0
    %229 = vmatpush1.msra.mxu0 %v99
    %230 = vmatprep.subr.mxu0 0.0
    %231 = vmatpush1.msra.mxu0 %v100
    %232 = vmatprep.subr.mxu0 0.0
    %233 = vmatpush1.msra.mxu0 %v101
    %234 = vmatprep.subr.mxu0 0.0
    %235 = vmatpush1.msra.mxu0 %v102
    %236 = vmatprep.subr.mxu0 0.0
    %237 = vmatpush1.msra.mxu0 %v103
    %238 = vmatprep.subr.mxu0 0.0
    %239 = vmatpush1.msra.mxu0 %v104
    %240 = vmatprep.subr.mxu0 0.0
    %241 = vmatpush1.msra.mxu0 %v105
    %242 = vmatprep.subr.mxu0 0.0
    %243 = vmatpush1.msra.mxu0 %v106
    %244 = vmatprep.subr.mxu0 0.0
    %245 = vmatpush1.msra.mxu0 %v107
    %246 = vmatprep.subr.mxu0 0.0
    %247 = vmatpush1.msra.mxu0 %v108
    %248 = vmatprep.subr.mxu0 0.0
    %249 = vmatpush1.msra.mxu0 %v109
    %250 = vmatprep.mubr.f32.mxu0 %v113
    %251 = vmatmul.mubr.f32.gmra.mrb[0].mxu0 %v45
    %v252 = vpop.f32.mrb[0].mxu0
    %v253 = vadd.f32 %v183, %v252
    %v254 = vpop.f32.mrb[0].mxu0
    %255 = vdwg.mxu0
    %256 = vst [vmem:[%s3] sm:$0xf] %v253
    %v257 = vld [vmem:[#allocation4] sm:$0xff]
    %v258 = vld [vmem:[#allocation4 + $0x8] sm:$0xff]
    %v259 = vld [vmem:[#allocation4 + $0x10] sm:$0xff]
    %v260 = vld [vmem:[#allocation4 + $0x18] sm:$0xff]
    %v261 = vld [vmem:[#allocation4 + $0x20] sm:$0xff]
    %v262 = vld [vmem:[#allocation4 + $0x28] sm:$0xff]
    %v263 = vld [vmem:[#allocation4 + $0x30] sm:$0xff]
    %v264 = vld [vmem:[#allocation4 + $0x38] sm:$0xff]
    %v265 = vld [vmem:[#allocation4 + $0x40] sm:$0xff]
    %v266 = vld [vmem:[#allocation4 + $0x48] sm:$0xff]
    %v267 = vld [vmem:[#allocation4 + $0x50] sm:$0xff]
    %v268 = vld [vmem:[#allocation4 + $0x58] sm:$0xff]
    %v269 = vld [vmem:[#allocation4 + $0x60] sm:$0xff]
    %v270 = vld [vmem:[#allocation4 + $0x68] sm:$0xff]
    %v271 = vld [vmem:[#allocation4 + $0x70] sm:$0xff]
    %v272 = vld [vmem:[#allocation4 + $0x78] sm:$0xff]
    %v273 = vld [vmem:[#allocation4 + $0x80] sm:$0xff]
    %v274 = vld [vmem:[#allocation4 + $0x88] sm:$0xff]
    %v275 = vld [vmem:[#allocation4 + $0x90] sm:$0xff]
    %v276 = vld [vmem:[#allocation4 + $0x98] sm:$0xff]
    %v277 = vld [vmem:[#allocation4 + $0xa0] sm:$0xff]
    %v278 = vld [vmem:[#allocation4 + $0xa8] sm:$0xff]
    %v279 = vld [vmem:[#allocation4 + $0xb0] sm:$0xff]
    %v280 = vld [vmem:[#allocation4 + $0xb8] sm:$0xff]
    %v281 = vld [vmem:[#allocation4 + $0xc0] sm:$0xff]
    %v282 = vld [vmem:[#allocation4 + $0xc8] sm:$0xff]
    %v283 = vld [vmem:[#allocation4 + $0xd0] sm:$0xff]
    %v284 = vld [vmem:[#allocation4 + $0xd8] sm:$0xff]
    %v285 = vld [vmem:[#allocation4 + $0xe0] sm:$0xff]
    %v286 = vld [vmem:[#allocation4 + $0xe8] sm:$0xff]
    %v287 = vld [vmem:[#allocation4 + $0xf0] sm:$0xff]
    %v288 = vld [vmem:[#allocation4 + $0xf8] sm:$0xff]
    %v289 = vld [vmem:[#allocation4 + $0x100] sm:$0xff]
    %v290 = vld [vmem:[#allocation4 + $0x108] sm:$0xff]
    %v291 = vld [vmem:[#allocation4 + $0x110] sm:$0xff]
    %v292 = vld [vmem:[#allocation4 + $0x118] sm:$0xff]
    %v293 = vld [vmem:[#allocation4 + $0x120] sm:$0xff]
    %v294 = vld [vmem:[#allocation4 + $0x128] sm:$0xff]
    %v295 = vld [vmem:[#allocation4 + $0x130] sm:$0xff]
    %v296 = vld [vmem:[#allocation4 + $0x138] sm:$0xff]
    %v297 = vld [vmem:[#allocation4 + $0x140] sm:$0xff]
    %v298 = vld [vmem:[#allocation4 + $0x148] sm:$0xff]
    %v299 = vld [vmem:[#allocation4 + $0x150] sm:$0xff]
    %v300 = vld [vmem:[#allocation4 + $0x158] sm:$0xff]
    %v301 = vld [vmem:[#allocation4 + $0x160] sm:$0xff]
    %v302 = vld [vmem:[#allocation4 + $0x168] sm:$0xff]
    %v303 = vld [vmem:[#allocation4 + $0x170] sm:$0xff]
    %v304 = vld [vmem:[#allocation4 + $0x178] sm:$0xff]
    %v305 = vld [vmem:[#allocation4 + $0x180] sm:$0xff]
    %v306 = vld [vmem:[#allocation4 + $0x188] sm:$0xff]
    %v307 = vld [vmem:[#allocation4 + $0x190] sm:$0xff]
    %v308 = vld [vmem:[#allocation4 + $0x198] sm:$0xff]
    %v309 = vld [vmem:[#allocation4 + $0x1a0] sm:$0xff]
    %v310 = vld [vmem:[#allocation4 + $0x1a8] sm:$0xff]
    %v311 = vld [vmem:[#allocation4 + $0x1b0] sm:$0xff]
    %v312 = vld [vmem:[#allocation4 + $0x1b8] sm:$0xff]
    %v313 = vld [vmem:[#allocation4 + $0x1c0] sm:$0xff]
    %v314 = vld [vmem:[#allocation4 + $0x1c8] sm:$0xff]
    %v315 = vld [vmem:[#allocation4 + $0x1d0] sm:$0xff]
    %v316 = vld [vmem:[#allocation4 + $0x1d8] sm:$0xff]
    %v317 = vld [vmem:[#allocation4 + $0x1e0] sm:$0xff]
    %v318 = vld [vmem:[#allocation4 + $0x1e8] sm:$0xff]
    %v319 = vld [vmem:[#allocation4 + $0x1f0] sm:$0xff]
    %v320 = vld [vmem:[#allocation4 + $0x1f8] sm:$0xff]
    %321 = vmatprep.subr.mxu0 %v258
    %322 = vmatpush1.msra.mxu0 %v257
    %323 = vmatprep.subr.mxu0 %v262
    %324 = vmatpush1.msra.mxu0 %v261
    %325 = vmatprep.subr.mxu0 %v266
    %326 = vmatpush1.msra.mxu0 %v265
    %327 = vmatprep.subr.mxu0 %v270
    %328 = vmatpush1.msra.mxu0 %v269
    %329 = vmatprep.subr.mxu0 %v274
    %330 = vmatpush1.msra.mxu0 %v273
    %331 = vmatprep.subr.mxu0 %v278
    %332 = vmatpush1.msra.mxu0 %v277
    %333 = vmatprep.subr.mxu0 %v282
    %334 = vmatpush1.msra.mxu0 %v281
    %335 = vmatprep.subr.mxu0 %v286
    %336 = vmatpush1.msra.mxu0 %v285
    %337 = vmatprep.subr.mxu0 %v290
    %338 = vmatpush1.msra.mxu0 %v289
    %339 = vmatprep.subr.mxu0 %v294
    %340 = vmatpush1.msra.mxu0 %v293
    %341 = vmatprep.subr.mxu0 %v298
    %342 = vmatpush1.msra.mxu0 %v297
    %343 = vmatprep.subr.mxu0 %v302
    %344 = vmatpush1.msra.mxu0 %v301
    %345 = vmatprep.subr.mxu0 %v306
    %346 = vmatpush1.msra.mxu0 %v305
    %347 = vmatprep.subr.mxu0 %v310
    %348 = vmatpush1.msra.mxu0 %v309
    %349 = vmatprep.subr.mxu0 %v314
    %350 = vmatpush1.msra.mxu0 %v313
    %351 = vmatprep.subr.mxu0 %v318
    %352 = vmatpush1.msra.mxu0 %v317
    %353 = vmatprep.subr.mxu0 0.0
    %354 = vmatpush1.msra.mxu0 0.0
    %355 = vmatprep.subr.mxu0 0.0
    %356 = vmatpush1.msra.mxu0 0.0
    %357 = vmatprep.subr.mxu0 0.0
    %358 = vmatpush1.msra.mxu0 0.0
    %359 = vmatprep.subr.mxu0 0.0
    %360 = vmatpush1.msra.mxu0 0.0
    %361 = vmatprep.subr.mxu0 0.0
    %362 = vmatpush1.msra.mxu0 0.0
    %363 = vmatprep.subr.mxu0 0.0
    %364 = vmatpush1.msra.mxu0 0.0
    %365 = vmatprep.subr.mxu0 0.0
    %366 = vmatpush1.msra.mxu0 0.0
    %367 = vmatprep.subr.mxu0 0.0
    %368 = vmatpush1.msra.mxu0 0.0
    %369 = vmatprep.subr.mxu0 0.0
    %370 = vmatpush1.msra.mxu0 0.0
    %371 = vmatprep.subr.mxu0 0.0
    %372 = vmatpush1.msra.mxu0 0.0
    %373 = vmatprep.subr.mxu0 0.0
    %374 = vmatpush1.msra.mxu0 0.0
    %375 = vmatprep.subr.mxu0 0.0
    %376 = vmatpush1.msra.mxu0 0.0
    %377 = vmatprep.subr.mxu0 0.0
    %378 = vmatpush1.msra.mxu0 0.0
    %379 = vmatprep.subr.mxu0 0.0
    %380 = vmatpush1.msra.mxu0 0.0
    %381 = vmatprep.subr.mxu0 0.0
    %382 = vmatpush1.msra.mxu0 0.0
    %383 = vmatprep.subr.mxu0 0.0
    %384 = vmatpush1.msra.mxu0 0.0
    %385 = vmatprep.mubr.f32.mxu0 0.0
    %386 = vmatmul.mubr.f32.gmra.mrb[0].mxu0 %v253
    %v387 = vpop.f32.mrb[0].mxu0
    %v388 = vadd.f32 0.0, %v387
    %v389 = vpop.f32.mrb[0].mxu0
    %v390 = vadd.f32 0.0, %v389
    %391 = vdwg.mxu0
    %392 = vmatprep.subr.mxu0 %v260
    %393 = vmatpush1.msra.mxu0 %v259
    %394 = vmatprep.subr.mxu0 %v264
    %395 = vmatpush1.msra.mxu0 %v263
    %396 = vmatprep.subr.mxu0 %v268
    %397 = vmatpush1.msra.mxu0 %v267
    %398 = vmatprep.subr.mxu0 %v272
    %399 = vmatpush1.msra.mxu0 %v271
    %400 = vmatprep.subr.mxu0 %v276
    %401 = vmatpush1.msra.mxu0 %v275
    %402 = vmatprep.subr.mxu0 %v280
    %403 = vmatpush1.msra.mxu0 %v279
    %404 = vmatprep.subr.mxu0 %v284
    %405 = vmatpush1.msra.mxu0 %v283
    %406 = vmatprep.subr.mxu0 %v288
    %407 = vmatpush1.msra.mxu0 %v287
    %408 = vmatprep.subr.mxu0 %v292
    %409 = vmatpush1.msra.mxu0 %v291
    %410 = vmatprep.subr.mxu0 %v296
    %411 = vmatpush1.msra.mxu0 %v295
    %412 = vmatprep.subr.mxu0 %v300
    %413 = vmatpush1.msra.mxu0 %v299
    %414 = vmatprep.subr.mxu0 %v304
    %415 = vmatpush1.msra.mxu0 %v303
    %416 = vmatprep.subr.mxu0 %v308
    %417 = vmatpush1.msra.mxu0 %v307
    %418 = vmatprep.subr.mxu0 %v312
    %419 = vmatpush1.msra.mxu0 %v311
    %420 = vmatprep.subr.mxu0 %v316
    %421 = vmatpush1.msra.mxu0 %v315
    %422 = vmatprep.subr.mxu0 %v320
    %423 = vmatpush1.msra.mxu0 %v319
    %424 = vmatprep.subr.mxu0 0.0
    %425 = vmatpush1.msra.mxu0 0.0
    %426 = vmatprep.subr.mxu0 0.0
    %427 = vmatpush1.msra.mxu0 0.0
    %428 = vmatprep.subr.mxu0 0.0
    %429 = vmatpush1.msra.mxu0 0.0
    %430 = vmatprep.subr.mxu0 0.0
    %431 = vmatpush1.msra.mxu0 0.0
    %432 = vmatprep.subr.mxu0 0.0
    %433 = vmatpush1.msra.mxu0 0.0
    %434 = vmatprep.subr.mxu0 0.0
    %435 = vmatpush1.msra.mxu0 0.0
    %436 = vmatprep.subr.mxu0 0.0
    %437 = vmatpush1.msra.mxu0 0.0
    %438 = vmatprep.subr.mxu0 0.0
    %439 = vmatpush1.msra.mxu0 0.0
    %440 = vmatprep.subr.mxu0 0.0
    %441 = vmatpush1.msra.mxu0 0.0
    %442 = vmatprep.subr.mxu0 0.0
    %443 = vmatpush1.msra.mxu0 0.0
    %444 = vmatprep.subr.mxu0 0.0
    %445 = vmatpush1.msra.mxu0 0.0
    %446 = vmatprep.subr.mxu0 0.0
    %447 = vmatpush1.msra.mxu0 0.0
    %448 = vmatprep.subr.mxu0 0.0
    %449 = vmatpush1.msra.mxu0 0.0
    %450 = vmatprep.subr.mxu0 0.0
    %451 = vmatpush1.msra.mxu0 0.0
    %452 = vmatprep.subr.mxu0 0.0
    %453 = vmatpush1.msra.mxu0 0.0
    %454 = vmatprep.subr.mxu0 0.0
    %455 = vmatpush1.msra.mxu0 0.0
    %456 = vmatprep.mubr.f32.mxu0 0.0
    %457 = vmatmul.mubr.f32.gmra.mrb[0].mxu0 %v253
    %v458 = vpop.f32.mrb[0].mxu0
    %v459 = vadd.f32 0.0, %v458
    %v460 = vpop.f32.mrb[0].mxu0
    %v461 = vadd.f32 0.0, %v460
    %462 = vdwg.mxu0
    %v467 = vcombine.low %v388, %v390
    %v468 = vcombine.low %v459, %v461
    %v471 = vsub.f32 %v44, %v467
    %v472 = vsub.f32 %v45, %v468
    %473 = vst [vmem:[%s4] sm:$0xff] %v471
    %474 = vst [vmem:[%s4 + $0x8] sm:$0xff] %v472
    // Predicated region
    $region22: #{dog_forward.1} parent=1 // pred_check
      _
    $region23: #{dog_forward.1} parent=1 // pred_check_branch
      %476 = sbr.rel (0) target = $region25
    $region24: #{dog_forward.1} parent=1 // pred_region
      _
    $region25: #{dog_forward.1} parent=1 // pred_fallthru
      _
    // Predicated region
    $region26: #{dog_forward.1} parent=1 // pred_check
      _
    $region27: #{dog_forward.1} parent=1 // pred_check_branch
      %478 = sbr.rel (0) target = $region29
    $region28: #{dog_forward.1} parent=1 // pred_region
      _
    $region29: #{dog_forward.1} parent=1 // pred_fallthru
      _
    // Predicated region
    $region30: #{dog_forward.1} parent=1 // pred_check
      _
    $region31: #{dog_forward.1} parent=1 // pred_check_branch
      %480 = sbr.rel (0) target = $region33
    $region32: #{dog_forward.1} parent=1 // pred_region
      _
    $region33: #{dog_forward.1} parent=1 // pred_fallthru
      _
    // Predicated region
    $region34: #{dog_forward.1} parent=1 // pred_check
      _
    $region35: #{dog_forward.1} parent=1 // pred_check_branch
      %482 = sbr.rel (0) target = $region37
    $region36: #{dog_forward.1} parent=1 // pred_region
      _
    $region37: #{dog_forward.1} parent=1 // pred_fallthru
      _
    %483 = vsyncpa [#allocation3], 1
    %484 = vsyncpa [#allocation5], 1

</llo_original>
